<compile_context>
chip_gen: v5e
topology: v5e:2x2
jax: 0.10.0
libtpu: 0.0.40
codegen_flags: <defaults>
</compile_context>

<pallas_src>
import functools

import jax
import jax.numpy as jnp
from jax.experimental import pallas as pl
from jax.experimental.pallas import tpu as pltpu

_LANE = 128


def _round_up(n, m):
    return ((n + m - 1) // m) * m


def _vmem_budget_bytes():
    """Generation-aware VMEM budget and physical capacity (per TensorCore)."""
    try:
        cap = int(pltpu.get_tpu_info().vmem_capacity_bytes)
    except Exception:
        cap = None
    if not cap or cap <= 0:
        cap = 64 << 20                      # conservative fallback (v7x per-TC size)
    budget = min(int(cap * 0.45), 80 << 20)  # ~57 MiB on 128-MiB parts, ~28 MiB on v7x
    return budget, cap


# ---------------------------------------------------------------------------
# Parameter preparation: pad + cast ONCE, outside the per-call path.
# ---------------------------------------------------------------------------
def prepare_params(params, *, residual, compute_dtype=jnp.float32):
    """Pad (lane-dense outputs) and cast weights once.

    Note: on v5e prefer compute_dtype=jnp.bfloat16 — f32 MXU operands are emulated
    via multi-pass bf16 there (~3x slower); accumulation and the bias/ReLU epilogue
    stay f32 either way.
    """
    weights = params["layers"]
    in_dim = int(weights[0][0].shape[0])
    dims = [in_dim] + [int(w.shape[1]) for w, _ in weights]
    # Hidden/output feature dims padded to the 128-lane granule so every store and
    # intermediate stays lane-dense; the input feature dim is left unpadded to keep
    # the x HBM stream minimal.  (256-granule padding only when it is free — padding
    # small dims to 256 would just waste HBM bytes and FLOPs.)
    dims_pad = [in_dim] + [_round_up(d, _LANE) for d in dims[1:]]

    packed = []
    for li, (w, b) in enumerate(weights):
        kp, np_ = dims_pad[li], dims_pad[li + 1]
        w_p = jnp.zeros((kp, np_), compute_dtype).at[:w.shape[0], :w.shape[1]].set(
            w.astype(compute_dtype))
        b_p = jnp.zeros((1, np_), jnp.float32).at[0, :b.shape[0]].set(
            b.astype(jnp.float32))
        packed.append((w_p, b_p))

    convert = None
    if residual:
        wc, bc = params["convert"]
        out_pad = dims_pad[-1]
        wc_p = jnp.zeros((in_dim, out_pad), compute_dtype).at[:, :wc.shape[1]].set(
            wc.astype(compute_dtype))
        bc_p = jnp.zeros((1, out_pad), jnp.float32).at[0, :bc.shape[0]].set(
            bc.astype(jnp.float32))
        convert = (wc_p, bc_p)

    return dict(layers=packed, convert=convert, in_dim=in_dim, out_dim=dims[-1],
                dims_pad=dims_pad, residual=residual, compute_dtype=compute_dtype)


# ---------------------------------------------------------------------------
# Fused kernel: all layers in one kernel, weights resident, h stays in VMEM.
# ---------------------------------------------------------------------------
def _mlp_fused_kernel(x_ref, *refs, num_linear, residual, compute_dtype):
    o_ref = refs[-1]
    p = refs[:-1]                       # (w0, b0, w1, b1, ..., [wc, bc])
    x = x_ref[...]                      # (TM, in_dim) row tile (stream dtype)
    h = x.astype(compute_dtype)
    y = None
    k = 0
    for layer in range(num_linear):
        w = p[k][...]                   # (K, N_pad) in compute_dtype (resident)
        b = p[k + 1][...]               # (1, N_pad) f32
        k += 2
        acc = jnp.dot(h, w, preferred_element_type=jnp.float32)   # MXU, f32 acc
        acc = acc + b                                              # f32 VPU epilogue
        if layer < num_linear - 1:
            h = jnp.maximum(acc, 0.0).astype(compute_dtype)        # fused ReLU
        else:
            y = acc
    if residual:
        wc = p[k][...]
        bc = p[k + 1][...]
        y = y + jnp.dot(x.astype(compute_dtype), wc,
                        preferred_element_type=jnp.float32) + bc
    o_ref[...] = y.astype(o_ref.dtype)


def _fused_row_tile(n, in_dim, dims_pad, resident_bytes, stream_bytes, out_bytes,
                    budget, max_tile):
    """Largest row tile (multiple of 128) whose working set fits the budget."""
    out_pad = dims_pad[-1]
    widest = max([in_dim] + dims_pad[1:])

    def working_set(tm):
        io = 2 * tm * in_dim * stream_bytes + 2 * tm * out_pad * out_bytes  # dbl-buf
        live = 2 * tm * widest * 4                                          # f32 acts
        return resident_bytes + io + live

    n128 = _round_up(max(n, 1), _LANE)
    # Keep >=2 row-grid steps when the batch allows (megacore split on v7x).
    grid_cap = max(_LANE, ((n128 // 2) // _LANE) * _LANE)
    tm = max(_LANE, min(max_tile, grid_cap))
    while tm > _LANE and working_set(tm) > budget:
        tm -= _LANE
    if working_set(tm) > budget:
        return None
    return tm


# ---------------------------------------------------------------------------
# Streaming fallback: per-layer N-tiled matmul with fused bias/ReLU epilogue.
# Used automatically when the resident weights exceed the per-core VMEM budget.
# ---------------------------------------------------------------------------
def _linear_bias_act_kernel(x_ref, w_ref, b_ref, o_ref, *, relu, compute_dtype):
    acc = jnp.dot(x_ref[...].astype(compute_dtype), w_ref[...],
                  preferred_element_type=jnp.float32)
    y = acc + b_ref[...]
    if relu:
        y = jnp.maximum(y, 0.0)
    o_ref[...] = y.astype(o_ref.dtype)


def _linear_layer_streaming(x2d, w, b, *, relu, out_dtype, compute_dtype, budget, cap):
    n, K = x2d.shape
    Np = w.shape[1]                           # lane-padded already
    xb = jnp.dtype(x2d.dtype).itemsize
    wb = jnp.dtype(w.dtype).itemsize
    ob = jnp.dtype(out_dtype).itemsize

    def working_set(tm, tn):
        return 2 * (tm * K * xb + K * tn * wb + tn * 4 + tm * tn * ob) + tm * tn * 4

    tm = tn = 256
    while working_set(tm, tn) > budget and (tm > _LANE or tn > _LANE):
        if tm >= tn and tm > _LANE:
            tm //= 2
        else:
            tn //= 2
    tn = min(tn, Np)
    if Np % tn:
        tn = _LANE
    tm = min(tm, _round_up(max(n, 1), _LANE))

    n_pad = _round_up(max(n, 1), tm)
    x_p = x2d if n_pad == n else jnp.zeros((n_pad, K), x2d.dtype).at[:n].set(x2d)

    grid = (n_pad // tm, Np // tn)
    vmem_limit = int(min(cap, max(working_set(tm, tn) + (4 << 20), 32 << 20)))

    y = pl.pallas_call(
        functools.partial(_linear_bias_act_kernel, relu=relu,
                          compute_dtype=compute_dtype),
        out_shape=jax.ShapeDtypeStruct((n_pad, Np), out_dtype),
        grid=grid,
        in_specs=[pl.BlockSpec((tm, K), lambda i, j: (i, 0)),
                  pl.BlockSpec((K, tn), lambda i, j: (0, j)),
                  pl.BlockSpec((1, tn), lambda i, j: (0, j))],
        out_specs=pl.BlockSpec((tm, tn), lambda i, j: (i, j)),
        compiler_params=pltpu.CompilerParams(
            dimension_semantics=("parallel", "parallel"),
            vmem_limit_bytes=vmem_limit),
    )(x_p, w, b)
    return y[:n]


def _mlp_forward_streaming(prep, x2d, budget, cap):
    # TODO(synk): K is kept whole per layer; add K-tiling (pltpu.emit_pipeline) for
    # layers whose single K-stripe tiles still do not fit VMEM.
    cdt = prep["compute_dtype"]
    layers = prep["layers"]
    h = x2d
    for li, (w, b) in enumerate(layers):
        relu = li < len(layers) - 1
        inter_dtype = cdt if relu else jnp.float32
        h = _linear_layer_streaming(h, w, b, relu=relu, out_dtype=inter_dtype,
                                    compute_dtype=cdt, budget=budget, cap=cap)
    y = h
    if prep["residual"]:
        wc, bc = prep["convert"]
        r = _linear_layer_streaming(x2d, wc, bc, relu=False, out_dtype=jnp.float32,
                                    compute_dtype=cdt, budget=budget, cap=cap)
        y = y + r
    return y


# ---------------------------------------------------------------------------
# Forward wrapper.
# ---------------------------------------------------------------------------
def mlp_forward(prep, x, *, force_streaming=False):
    """x: (..., in_dim) -> (..., out_dim)."""
    in_dim = prep["in_dim"]
    out_dim = prep["out_dim"]
    dims_pad = prep["dims_pad"]
    residual = prep["residual"]
    cdt = prep["compute_dtype"]
    out_dtype = x.dtype

    lead = x.shape[:-1]
    x2d = x.reshape(-1, in_dim)
    n = x2d.shape[0]

    budget, cap = _vmem_budget_bytes()

    # Flat resident operand list (already padded/cast once in prepare_params).
    param_ops = []
    for w, b in prep["layers"]:
        param_ops += [w, b]
    if residual:
        wc, bc = prep["convert"]
        param_ops += [wc, bc]

    # Pallas double-buffers every input (even constant-index ones): count 2x.
    resident_bytes = 2 * sum(int(a.size) * a.dtype.itemsize for a in param_ops)

    # Move the x row stream in compute precision when narrower (halves HBM bytes);
    # f32 accumulation + f32 epilogue keep accuracy.
    stream_dtype = (cdt if jnp.dtype(cdt).itemsize < jnp.dtype(x2d.dtype).itemsize
                    else x2d.dtype)
    stream_bytes = jnp.dtype(stream_dtype).itemsize
    out_bytes = jnp.dtype(out_dtype).itemsize
    out_pad = dims_pad[-1]

    max_tile = 2048 if cap >= (96 << 20) else 1024
    tm = (None if force_streaming else
          _fused_row_tile(n, in_dim, dims_pad, resident_bytes, stream_bytes,
                          out_bytes, budget, max_tile))

    if tm is None:
        # Resident weights do not fit (e.g. large MLPs on v7x's 64 MiB VMEM).
        y2d = _mlp_forward_streaming(prep, x2d, budget, cap)
        return y2d[:, :out_dim].astype(out_dtype).reshape(*lead, out_dim)

    n_pad = _round_up(max(n, 1), tm)
    if n_pad == n and x2d.dtype == stream_dtype:
        x_p = x2d                                   # aligned batch: no wrapper copy
    else:
        x_p = jnp.zeros((n_pad, in_dim), stream_dtype).at[:n].set(
            x2d.astype(stream_dtype))

    grid = (n_pad // tm,)
    in_specs = [pl.BlockSpec((tm, in_dim), lambda i: (i, 0))]
    for a in param_ops:
        # Constant index map: block stays resident in VMEM across grid steps.
        in_specs.append(pl.BlockSpec(a.shape, lambda i: (0, 0)))

    io_tiles = 2 * tm * in_dim * stream_bytes + 2 * tm * out_pad * out_bytes
    live = 2 * tm * max([in_dim] + dims_pad[1:]) * 4
    ws = resident_bytes + io_tiles + live
    vmem_limit = int(min(cap, max(ws + (4 << 20), 32 << 20)))

    kernel = functools.partial(
        _mlp_fused_kernel,
        num_linear=len(prep["layers"]),
        residual=residual,
        compute_dtype=cdt,
    )

    y_pad = pl.pallas_call(
        kernel,
        out_shape=jax.ShapeDtypeStruct((n_pad, out_pad), out_dtype),
        grid=grid,
        in_specs=in_specs,
        out_specs=pl.BlockSpec((tm, out_pad), lambda i: (i, 0)),
        compiler_params=pltpu.CompilerParams(
            dimension_semantics=("parallel",),      # megacore split on v7x
            vmem_limit_bytes=vmem_limit),
    )(x_p, *param_ops)

    return y_pad[:n, :out_dim].reshape(*lead, out_dim)


# ---------------------------------------------------------------------------
# Parameter init (mirrors nn.Linear's U(-1/sqrt(fan_in), 1/sqrt(fan_in)))
# ---------------------------------------------------------------------------
def init_mlp_params(key, in_dim, out_dim, hidden_list, residual):
    params = {"layers": []}
    dims = [in_dim] + list(hidden_list) + [out_dim]
    for fan_in, fan_out in zip(dims[:-1], dims[1:]):
        key, kw, kb = jax.random.split(key, 3)
        bound = 1.0 / jnp.sqrt(fan_in)
        w = jax.random.uniform(kw, (fan_in, fan_out), jnp.float32, -bound, bound)
        b = jax.random.uniform(kb, (fan_out,), jnp.float32, -bound, bound)
        params["layers"].append((w, b))
    if residual:
        key, kw, kb = jax.random.split(key, 3)
        bound = 1.0 / jnp.sqrt(in_dim)
        wc = jax.random.uniform(kw, (in_dim, out_dim), jnp.float32, -bound, bound)
        bc = jax.random.uniform(kb, (out_dim,), jnp.float32, -bound, bound)
        params["convert"] = (wc, bc)
    return params


# ---------------------------------------------------------------------------
# Pure-JAX reference for a sanity check
# ---------------------------------------------------------------------------
def mlp_reference(params, x, *, residual):
    in_dim = params["layers"][0][0].shape[0]
    lead = x.shape[:-1]
    h = x.reshape(-1, in_dim)
    for w, b in params["layers"][:-1]:
        h = jnp.maximum(h @ w + b, 0.0)
    w_last, b_last = params["layers"][-1]
    y = h @ w_last + b_last
    if residual:
        wc, bc = params["convert"]
        y = y + x.reshape(-1, in_dim) @ wc + bc
    return y.reshape(*lead, w_last.shape[1])


if __name__ == "__main__":
    key = jax.random.PRNGKey(0)

    in_dim, out_dim = 32, 16
    hidden_list = [64, 64]
    residual = True

    key, kparam, kx = jax.random.split(key, 3)
    params = init_mlp_params(kparam, in_dim, out_dim, hidden_list, residual)

    # small batch: (batch=2, seq=8, in_dim=32)
    x = jax.random.normal(kx, (2, 8, in_dim), jnp.float32)

    y_ref = mlp_reference(params, x, residual=residual)

    # f32 MXU operands: exact match with the reference (fused resident-weight path).
    prep32 = prepare_params(params, residual=residual, compute_dtype=jnp.float32)
    y32 = jax.block_until_ready(mlp_forward(prep32, x))
    assert y32.shape == (2, 8, out_dim)
    assert jnp.allclose(y32, y_ref, atol=1e-5, rtol=1e-5), "f32 fused mismatch"

    # bf16 MXU operands + bf16 x stream (fast path on v6e/v7x, recommended on v5e),
    # f32 accumulation + f32 bias/ReLU epilogue.
    prepbf = prepare_params(params, residual=residual, compute_dtype=jnp.bfloat16)
    ybf = jax.block_until_ready(mlp_forward(prepbf, x))
    assert ybf.shape == (2, 8, out_dim)
    assert jnp.allclose(ybf, y_ref, atol=5e-2, rtol=5e-2), "bf16 fused mismatch"

    # Weight-streaming fallback (chosen automatically when resident weights exceed
    # the per-core VMEM budget, e.g. big MLPs on v7x): force it to verify correctness.
    ystr = jax.block_until_ready(mlp_forward(prep32, x, force_streaming=True))
    assert ystr.shape == (2, 8, out_dim)
    assert jnp.allclose(ystr, y_ref, atol=1e-5, rtol=1e-5), "streaming mismatch"

    print("KERNEL_OK")
</pallas_src>

<mosaic_0001>
module attributes {stable_mosaic.version = 11 : i64} {
  func.func @_mlp_fused_kernel(%arg0: i32, %arg1: memref<128x32xf32, #tpu.memory_space<vmem>>, %arg2: memref<32x128xf32, #tpu.memory_space<vmem>>, %arg3: memref<1x128xf32, #tpu.memory_space<vmem>>, %arg4: memref<128x128xf32, #tpu.memory_space<vmem>>, %arg5: memref<1x128xf32, #tpu.memory_space<vmem>>, %arg6: memref<128x128xf32, #tpu.memory_space<vmem>>, %arg7: memref<1x128xf32, #tpu.memory_space<vmem>>, %arg8: memref<32x128xf32, #tpu.memory_space<vmem>>, %arg9: memref<1x128xf32, #tpu.memory_space<vmem>>, %arg10: memref<128x128xf32, #tpu.memory_space<vmem>>) attributes {dimension_semantics = [#tpu.dimension_semantics<parallel>], iteration_bounds = array<i64: 1>, scalar_prefetch = 0 : i64, scratch_operands = 0 : i64, tpu.core_type = #tpu.core_type<tc>, window_params = [{transform_indices = @transform_0, window_bounds = array<i64: 128, 32>}, {pipeline_mode = #tpu.pipeline_mode<synchronous>, transform_indices = @transform_1, window_bounds = array<i64: 32, 128>}, {pipeline_mode = #tpu.pipeline_mode<synchronous>, transform_indices = @transform_2, window_bounds = array<i64: 1, 128>}, {pipeline_mode = #tpu.pipeline_mode<synchronous>, transform_indices = @transform_3, window_bounds = array<i64: 128, 128>}, {pipeline_mode = #tpu.pipeline_mode<synchronous>, transform_indices = @transform_4, window_bounds = array<i64: 1, 128>}, {pipeline_mode = #tpu.pipeline_mode<synchronous>, transform_indices = @transform_5, window_bounds = array<i64: 128, 128>}, {pipeline_mode = #tpu.pipeline_mode<synchronous>, transform_indices = @transform_6, window_bounds = array<i64: 1, 128>}, {pipeline_mode = #tpu.pipeline_mode<synchronous>, transform_indices = @transform_7, window_bounds = array<i64: 32, 128>}, {pipeline_mode = #tpu.pipeline_mode<synchronous>, transform_indices = @transform_8, window_bounds = array<i64: 1, 128>}, {transform_indices = @transform_9, window_bounds = array<i64: 128, 128>}]} {
    %c0 = arith.constant 0 : index
    %c0_0 = arith.constant 0 : index
    %0 = vector.load %arg1[%c0, %c0_0] : memref<128x32xf32, #tpu.memory_space<vmem>>, vector<128x32xf32>
    %c0_1 = arith.constant 0 : index
    %c0_2 = arith.constant 0 : index
    %1 = vector.load %arg2[%c0_1, %c0_2] : memref<32x128xf32, #tpu.memory_space<vmem>>, vector<32x128xf32>
    %c0_3 = arith.constant 0 : index
    %c0_4 = arith.constant 0 : index
    %2 = vector.load %arg3[%c0_3, %c0_4] : memref<1x128xf32, #tpu.memory_space<vmem>>, vector<1x128xf32>
    %cst = arith.constant dense<0.000000e+00> : vector<128x128xf32>
    %3 = tpu.matmul %0, %1, %cst {dimension_numbers = #tpu.dot_dimension_numbers<[1], [0], [0], [1], [0, 0, 1, 1], [], []>} : vector<128x32xf32>, vector<32x128xf32>, vector<128x128xf32> -> vector<128x128xf32>
    %4 = vector.broadcast %2 : vector<1x128xf32> to vector<128x128xf32>
    %5 = arith.addf %3, %4 : vector<128x128xf32>
    %cst_5 = arith.constant 0.000000e+00 : f32
    %6 = vector.broadcast %cst_5 : f32 to vector<128x128xf32>
    %7 = arith.maximumf %5, %6 : vector<128x128xf32>
    %c0_6 = arith.constant 0 : index
    %c0_7 = arith.constant 0 : index
    %8 = vector.load %arg4[%c0_6, %c0_7] : memref<128x128xf32, #tpu.memory_space<vmem>>, vector<128x128xf32>
    %c0_8 = arith.constant 0 : index
    %c0_9 = arith.constant 0 : index
    %9 = vector.load %arg5[%c0_8, %c0_9] : memref<1x128xf32, #tpu.memory_space<vmem>>, vector<1x128xf32>
    %cst_10 = arith.constant dense<0.000000e+00> : vector<128x128xf32>
    %10 = tpu.matmul %7, %8, %cst_10 {dimension_numbers = #tpu.dot_dimension_numbers<[1], [0], [0], [1], [0, 0, 1, 1], [], []>} : vector<128x128xf32>, vector<128x128xf32>, vector<128x128xf32> -> vector<128x128xf32>
    %11 = vector.broadcast %9 : vector<1x128xf32> to vector<128x128xf32>
    %12 = arith.addf %10, %11 : vector<128x128xf32>
    %cst_11 = arith.constant 0.000000e+00 : f32
    %13 = vector.broadcast %cst_11 : f32 to vector<128x128xf32>
    %14 = arith.maximumf %12, %13 : vector<128x128xf32>
    %c0_12 = arith.constant 0 : index
    %c0_13 = arith.constant 0 : index
    %15 = vector.load %arg6[%c0_12, %c0_13] : memref<128x128xf32, #tpu.memory_space<vmem>>, vector<128x128xf32>
    %c0_14 = arith.constant 0 : index
    %c0_15 = arith.constant 0 : index
    %16 = vector.load %arg7[%c0_14, %c0_15] : memref<1x128xf32, #tpu.memory_space<vmem>>, vector<1x128xf32>
    %cst_16 = arith.constant dense<0.000000e+00> : vector<128x128xf32>
    %17 = tpu.matmul %14, %15, %cst_16 {dimension_numbers = #tpu.dot_dimension_numbers<[1], [0], [0], [1], [0, 0, 1, 1], [], []>} : vector<128x128xf32>, vector<128x128xf32>, vector<128x128xf32> -> vector<128x128xf32>
    %18 = vector.broadcast %16 : vector<1x128xf32> to vector<128x128xf32>
    %19 = arith.addf %17, %18 : vector<128x128xf32>
    %c0_17 = arith.constant 0 : index
    %c0_18 = arith.constant 0 : index
    %20 = vector.load %arg8[%c0_17, %c0_18] : memref<32x128xf32, #tpu.memory_space<vmem>>, vector<32x128xf32>
    %c0_19 = arith.constant 0 : index
    %c0_20 = arith.constant 0 : index
    %21 = vector.load %arg9[%c0_19, %c0_20] : memref<1x128xf32, #tpu.memory_space<vmem>>, vector<1x128xf32>
    %cst_21 = arith.constant dense<0.000000e+00> : vector<128x128xf32>
    %22 = tpu.matmul %0, %20, %cst_21 {dimension_numbers = #tpu.dot_dimension_numbers<[1], [0], [0], [1], [0, 0, 1, 1], [], []>} : vector<128x32xf32>, vector<32x128xf32>, vector<128x128xf32> -> vector<128x128xf32>
    %23 = arith.addf %19, %22 : vector<128x128xf32>
    %24 = vector.broadcast %21 : vector<1x128xf32> to vector<128x128xf32>
    %25 = arith.addf %23, %24 : vector<128x128xf32>
    %c0_22 = arith.constant 0 : index
    %c0_23 = arith.constant 0 : index
    %26 = vector.load %arg10[%c0_22, %c0_23] : memref<128x128xf32, #tpu.memory_space<vmem>>, vector<128x128xf32>
    tpu.vector_store %arg10[%c0_22, %c0_23], %25 {strides = array<i32>} : memref<128x128xf32, #tpu.memory_space<vmem>>, vector<128x128xf32>,
    return
  }
  func.func @transform_0(%arg0: i32) -> (i32, i32) {
    %c0_i32 = arith.constant 0 : i32
    %c0_i32_0 = arith.constant 0 : i32
    return %arg0, %c0_i32 : i32, i32
  }
  func.func @transform_1(%arg0: i32) -> (i32, i32) {
    %c0_i32 = arith.constant 0 : i32
    %c0_i32_0 = arith.constant 0 : i32
    %c0_i32_1 = arith.constant 0 : i32
    return %c0_i32, %c0_i32_0 : i32, i32
  }
  func.func @transform_2(%arg0: i32) -> (i32, i32) {
    %c0_i32 = arith.constant 0 : i32
    %c0_i32_0 = arith.constant 0 : i32
    %c0_i32_1 = arith.constant 0 : i32
    return %c0_i32, %c0_i32_0 : i32, i32
  }
  func.func @transform_3(%arg0: i32) -> (i32, i32) {
    %c0_i32 = arith.constant 0 : i32
    %c0_i32_0 = arith.constant 0 : i32
    %c0_i32_1 = arith.constant 0 : i32
    return %c0_i32, %c0_i32_0 : i32, i32
  }
  func.func @transform_4(%arg0: i32) -> (i32, i32) {
    %c0_i32 = arith.constant 0 : i32
    %c0_i32_0 = arith.constant 0 : i32
    %c0_i32_1 = arith.constant 0 : i32
    return %c0_i32, %c0_i32_0 : i32, i32
  }
  func.func @transform_5(%arg0: i32) -> (i32, i32) {
    %c0_i32 = arith.constant 0 : i32
    %c0_i32_0 = arith.constant 0 : i32
    %c0_i32_1 = arith.constant 0 : i32
    return %c0_i32, %c0_i32_0 : i32, i32
  }
  func.func @transform_6(%arg0: i32) -> (i32, i32) {
    %c0_i32 = arith.constant 0 : i32
    %c0_i32_0 = arith.constant 0 : i32
    %c0_i32_1 = arith.constant 0 : i32
    return %c0_i32, %c0_i32_0 : i32, i32
  }
  func.func @transform_7(%arg0: i32) -> (i32, i32) {
    %c0_i32 = arith.constant 0 : i32
    %c0_i32_0 = arith.constant 0 : i32
    %c0_i32_1 = arith.constant 0 : i32
    return %c0_i32, %c0_i32_0 : i32, i32
  }
  func.func @transform_8(%arg0: i32) -> (i32, i32) {
    %c0_i32 = arith.constant 0 : i32
    %c0_i32_0 = arith.constant 0 : i32
    %c0_i32_1 = arith.constant 0 : i32
    return %c0_i32, %c0_i32_0 : i32, i32
  }
  func.func @transform_9(%arg0: i32) -> (i32, i32) {
    %c0_i32 = arith.constant 0 : i32
    %c0_i32_0 = arith.constant 0 : i32
    return %arg0, %c0_i32 : i32, i32
  }
}

</mosaic_0001>

<llo_original>
// kernel: tpu_custom_call.1
$region0: #{tpu_custom_call.1}
  #allocation0 [shape = 'u32[]', space=smem, size = 0x4, offset = 0x4, fixed_abs, tag = 'smem constant byte address 0x4 - core index']
  #allocation1 [shape = 'u32[72,128]{1,0:T(1,128)}', space=vmem, size = 0x9000, scoped, tag = 'internal scratch']
  %s0 = inlined_call_operand.vmem [shape: f32[128,32], index: 0, kind: input, shape index: {}]
  %s1 = inlined_call_operand.vmem [shape: f32[32,128], index: 1, kind: input, shape index: {}]
  %s2 = inlined_call_operand.vmem [shape: f32[1,128], index: 2, kind: input, shape index: {}]
  %s3 = inlined_call_operand.vmem [shape: f32[128,128], index: 3, kind: input, shape index: {}]
  %s4 = inlined_call_operand.vmem [shape: f32[1,128], index: 4, kind: input, shape index: {}]
  %s5 = inlined_call_operand.hbm [shape: f32[128,128], index: 5, kind: input, shape index: {}]
  %s6 = inlined_call_operand.vmem [shape: f32[1,128], index: 6, kind: input, shape index: {}]
  %s7 = inlined_call_operand.hbm [shape: f32[32,128], index: 7, kind: input, shape index: {}]
  %s8 = inlined_call_operand.vmem [shape: f32[1,128], index: 8, kind: input, shape index: {}]
  %s9 = inlined_call_operand.hbm [shape: f32[128,128], index: 9, kind: output, shape index: {}]
  %s10 = sld [smem:[#allocation0]]
  $region54: #{tpu_custom_call.1} parent=0
    _
  %s12 = ssub.s32 1, %s10
  %s13 = scalar_select 0, %s12, %s10
  $region1: #{tpu_custom_call.1} parent=0
    #allocation2 [shape = 'u8[65536]{0}', space=vmem, size = 0x10000, scoped, tag = 'input window, operand 5, single buffered']
    #allocation3 [shape = 's32[1]{0}', space=sflag, size = 0x4, scoped, tag = 'scoped memory for tpu_custom_call.1']
    #allocation4 [shape = 's32[1]{0}', space=sflag, size = 0x4, scoped, tag = 'scoped memory for tpu_custom_call.1']
    #allocation5 [shape = 'u8[16384]{0}', space=vmem, size = 0x4000, scoped, tag = 'input window, operand 7, single buffered']
    #allocation6 [shape = 's32[1]{0}', space=sflag, size = 0x4, scoped, tag = 'scoped memory for tpu_custom_call.1']
    #allocation7 [shape = 'u8[65536]{0}', space=vmem, size = 0x10000, scoped, tag = 'output window, operand 0, single buffered']
    %14 = vsyncpa [#allocation3], 0
    %15 = vsyncpa [#allocation6], 0
    %16 = vsyncpa [#allocation4], 0
    // Predicated region
    $region2: #{tpu_custom_call.1} parent=1 // pred_check
      _
    $region3: #{tpu_custom_call.1} parent=1 // pred_check_branch
      %18 = sbr.rel (0) target = $region5
    $region4: #{tpu_custom_call.1} parent=1 // pred_region
      _
    $region5: #{tpu_custom_call.1} parent=1 // pred_fallthru
      _
    // Predicated region
    $region6: #{tpu_custom_call.1} parent=1 // pred_check
      _
    $region7: #{tpu_custom_call.1} parent=1 // pred_check_branch
      %20 = sbr.rel (0) target = $region9
    $region8: #{tpu_custom_call.1} parent=1 // pred_region
      _
    $region9: #{tpu_custom_call.1} parent=1 // pred_fallthru
      _
    // Predicated region
    $region10: #{tpu_custom_call.1} parent=1 // pred_check
      _
    $region11: #{tpu_custom_call.1} parent=1 // pred_check_branch
      %22 = sbr.rel (0) target = $region13
    $region12: #{tpu_custom_call.1} parent=1 // pred_region
      _
    $region13: #{tpu_custom_call.1} parent=1 // pred_fallthru
      _
    // Predicated region
    $region14: #{tpu_custom_call.1} parent=1 // pred_check
      _
    $region15: #{tpu_custom_call.1} parent=1 // pred_check_branch
      %24 = sbr.rel (0) target = $region17
    $region16: #{tpu_custom_call.1} parent=1 // pred_region
      _
    $region17: #{tpu_custom_call.1} parent=1 // pred_fallthru
      _
    // Predicated region
    $region18: #{tpu_custom_call.1} parent=1 // pred_check
      _
    $region19: #{tpu_custom_call.1} parent=1 // pred_check_branch
      %26 = sbr.rel (0) target = $region21
    $region20: #{tpu_custom_call.1} parent=1 // pred_region
      _
    $region21: #{tpu_custom_call.1} parent=1 // pred_fallthru
      _
    // Predicated region
    $region22: #{tpu_custom_call.1} parent=1 // pred_check
      _
    $region23: #{tpu_custom_call.1} parent=1 // pred_check_branch
      %28 = sbr.rel (0) target = $region25
    $region24: #{tpu_custom_call.1} parent=1 // pred_region
      %30 = vsyncadd [#allocation3], 0
      %s31 = sshll.u32 %s5, 4
      %s32 = int_to_ptr.hbm [resolvable:$true] %s31
      %s33 = sshll.u32 [#allocation2], 4
      %s34 = int_to_ptr.vmem [resolvable:$true] %s33
      %39 = dma.hbm_to_vmem [thread:$0]  %s32, 2048, %s34, [#allocation3], 128, 128, 8
    $region25: #{tpu_custom_call.1} parent=1 // pred_fallthru
      _
    // Predicated region
    $region26: #{tpu_custom_call.1} parent=1 // pred_check
      _
    $region27: #{tpu_custom_call.1} parent=1 // pred_check_branch
      %41 = sbr.rel (0) target = $region29
    $region28: #{tpu_custom_call.1} parent=1 // pred_region
      _
    $region29: #{tpu_custom_call.1} parent=1 // pred_fallthru
      _
    // Predicated region
    $region30: #{tpu_custom_call.1} parent=1 // pred_check
      _
    $region31: #{tpu_custom_call.1} parent=1 // pred_check_branch
      %43 = sbr.rel (0) target = $region33
    $region32: #{tpu_custom_call.1} parent=1 // pred_region
      %45 = vsyncadd [#allocation6], 0
      %s46 = sshll.u32 %s7, 4
      %s47 = int_to_ptr.hbm [resolvable:$true] %s46
      %s48 = sshll.u32 [#allocation5], 4
      %s49 = int_to_ptr.vmem [resolvable:$true] %s48
      %54 = dma.hbm_to_vmem [thread:$0]  %s47, 512, %s49, [#allocation6], 128, 128, 8
    $region33: #{tpu_custom_call.1} parent=1 // pred_fallthru
      _
    // Predicated region
    $region34: #{tpu_custom_call.1} parent=1 // pred_check
      _
    $region35: #{tpu_custom_call.1} parent=1 // pred_check_branch
      %56 = sbr.rel (0) target = $region37
    $region36: #{tpu_custom_call.1} parent=1 // pred_region
      _
    $region37: #{tpu_custom_call.1} parent=1 // pred_fallthru
      _
    // Predicated region
    $region38: #{tpu_custom_call.1} parent=1 // pred_check
      _
    $region39: #{tpu_custom_call.1} parent=1 // pred_check_branch
      %58 = sbr.rel (0) target = $region41
    $region40: #{tpu_custom_call.1} parent=1 // pred_region
      %60 = dma.done [#allocation3], 2048
    $region41: #{tpu_custom_call.1} parent=1 // pred_fallthru
      _
    // Predicated region
    $region42: #{tpu_custom_call.1} parent=1 // pred_check
      _
    $region43: #{tpu_custom_call.1} parent=1 // pred_check_branch
      %62 = sbr.rel (0) target = $region45
    $region44: #{tpu_custom_call.1} parent=1 // pred_region
      %64 = dma.done [#allocation6], 512
    $region45: #{tpu_custom_call.1} parent=1 // pred_fallthru
      _
    %v65 = vld [vmem:[%s0] sm:$0xff]
    %v66 = vld [vmem:[%s0 + $0x8] sm:$0xff]
    %v67 = vld [vmem:[%s0 + $0x10] sm:$0xff]
    %v68 = vld [vmem:[%s0 + $0x18] sm:$0xff]
    %v69 = vld [vmem:[%s0 + $0x20] sm:$0xff]
    %v70 = vld [vmem:[%s0 + $0x28] sm:$0xff]
    %v71 = vld [vmem:[%s0 + $0x30] sm:$0xff]
    %v72 = vld [vmem:[%s0 + $0x38] sm:$0xff]
    %v73 = vld [vmem:[%s0 + $0x40] sm:$0xff]
    %v74 = vld [vmem:[%s0 + $0x48] sm:$0xff]
    %v75 = vld [vmem:[%s0 + $0x50] sm:$0xff]
    %v76 = vld [vmem:[%s0 + $0x58] sm:$0xff]
    %v77 = vld [vmem:[%s0 + $0x60] sm:$0xff]
    %v78 = vld [vmem:[%s0 + $0x68] sm:$0xff]
    %v79 = vld [vmem:[%s0 + $0x70] sm:$0xff]
    %v80 = vld [vmem:[%s0 + $0x78] sm:$0xff]
    %v81 = vld [vmem:[%s1] sm:$0xff]
    %v82 = vld [vmem:[%s1 + $0x8] sm:$0xff]
    %v83 = vld [vmem:[%s1 + $0x10] sm:$0xff]
    %v84 = vld [vmem:[%s1 + $0x18] sm:$0xff]
    %v85 = vld [vmem:[%s2] sm:$0x1]
    %v87 = vperm.slane %v85, 0
    %vm89 = vcmask 261120
    %v91 = vsel %vm89, %v65, 0
    %v94 = vsel %vm89, %v66, 0
    %v97 = vsel %vm89, %v67, 0
    %v100 = vsel %vm89, %v68, 0
    %v103 = vsel %vm89, %v69, 0
    %v106 = vsel %vm89, %v70, 0
    %v109 = vsel %vm89, %v71, 0
    %v112 = vsel %vm89, %v72, 0
    %v115 = vsel %vm89, %v73, 0
    %v118 = vsel %vm89, %v74, 0
    %v121 = vsel %vm89, %v75, 0
    %v124 = vsel %vm89, %v76, 0
    %v127 = vsel %vm89, %v77, 0
    %v130 = vsel %vm89, %v78, 0
    %v133 = vsel %vm89, %v79, 0
    %v136 = vsel %vm89, %v80, 0
    %138 = vmatpush.msra.mxu0 0.0
    %139 = vmatpush.msra.mxu0 0.0
    %140 = vmatpush.msra.mxu0 0.0
    %141 = vmatpush.msra.mxu0 0.0
    %142 = vmatpush.msra.mxu0 0.0
    %143 = vmatpush.msra.mxu0 0.0
    %144 = vmatpush.msra.mxu0 0.0
    %145 = vmatpush.msra.mxu0 0.0
    %146 = vmatpush.msra.mxu0 0.0
    %147 = vmatpush.msra.mxu0 0.0
    %148 = vmatpush.msra.mxu0 0.0
    %149 = vmatpush.msra.mxu0 0.0
    %150 = vmatpush.msra.mxu0 %v84
    %151 = vmatpush.msra.mxu0 %v83
    %152 = vmatpush.msra.mxu0 %v82
    %153 = vmatpush.msra.mxu0 %v81
    %154 = vmatmul.f32.gmra.mxu0 %v91
    %v155 = vpop.f32.mrf.mxu0
    %v156 = vadd.f32 %v87, %v155
    %157 = vmatmul.f32.gmra.mxu0 %v94
    %v158 = vpop.f32.mrf.mxu0
    %v159 = vadd.f32 %v87, %v158
    %160 = vmatmul.f32.gmra.mxu0 %v97
    %v161 = vpop.f32.mrf.mxu0
    %v162 = vadd.f32 %v87, %v161
    %163 = vmatmul.f32.gmra.mxu0 %v100
    %v164 = vpop.f32.mrf.mxu0
    %v165 = vadd.f32 %v87, %v164
    %166 = vmatmul.f32.gmra.mxu0 %v103
    %v167 = vpop.f32.mrf.mxu0
    %v168 = vadd.f32 %v87, %v167
    %169 = vmatmul.f32.gmra.mxu0 %v106
    %v170 = vpop.f32.mrf.mxu0
    %v171 = vadd.f32 %v87, %v170
    %172 = vmatmul.f32.gmra.mxu0 %v109
    %v173 = vpop.f32.mrf.mxu0
    %v174 = vadd.f32 %v87, %v173
    %175 = vmatmul.f32.gmra.mxu0 %v112
    %v176 = vpop.f32.mrf.mxu0
    %v177 = vadd.f32 %v87, %v176
    %178 = vmatmul.f32.gmra.mxu0 %v115
    %v179 = vpop.f32.mrf.mxu0
    %v180 = vadd.f32 %v87, %v179
    %181 = vmatmul.f32.gmra.mxu0 %v118
    %v182 = vpop.f32.mrf.mxu0
    %v183 = vadd.f32 %v87, %v182
    %184 = vmatmul.f32.gmra.mxu0 %v121
    %v185 = vpop.f32.mrf.mxu0
    %v186 = vadd.f32 %v87, %v185
    %187 = vmatmul.f32.gmra.mxu0 %v124
    %v188 = vpop.f32.mrf.mxu0
    %v189 = vadd.f32 %v87, %v188
    %190 = vmatmul.f32.gmra.mxu0 %v127
    %v191 = vpop.f32.mrf.mxu0
    %v192 = vadd.f32 %v87, %v191
    %193 = vmatmul.f32.gmra.mxu0 %v130
    %v194 = vpop.f32.mrf.mxu0
    %v195 = vadd.f32 %v87, %v194
    %196 = vmatmul.f32.gmra.mxu0 %v133
    %v197 = vpop.f32.mrf.mxu0
    %v198 = vadd.f32 %v87, %v197
    %199 = vmatmul.f32.gmra.mxu0 %v136
    %v200 = vpop.f32.mrf.mxu0
    %v201 = vadd.f32 %v87, %v200
    %202 = vdwg.mxu0
    %v203 = vmax.f32 %v156, 0.0
    %v204 = vmax.f32 %v159, 0.0
    %v205 = vmax.f32 %v162, 0.0
    %v206 = vmax.f32 %v165, 0.0
    %v207 = vmax.f32 %v168, 0.0
    %v208 = vmax.f32 %v171, 0.0
    %v209 = vmax.f32 %v174, 0.0
    %v210 = vmax.f32 %v177, 0.0
    %v211 = vmax.f32 %v180, 0.0
    %v212 = vmax.f32 %v183, 0.0
    %v213 = vmax.f32 %v186, 0.0
    %v214 = vmax.f32 %v189, 0.0
    %v215 = vmax.f32 %v192, 0.0
    %v216 = vmax.f32 %v195, 0.0
    %v217 = vmax.f32 %v198, 0.0
    %v218 = vmax.f32 %v201, 0.0
    %v219 = vld [vmem:[%s3] sm:$0xff]
    %v220 = vld [vmem:[%s3 + $0x8] sm:$0xff]
    %v221 = vld [vmem:[%s3 + $0x10] sm:$0xff]
    %v222 = vld [vmem:[%s3 + $0x18] sm:$0xff]
    %v223 = vld [vmem:[%s3 + $0x20] sm:$0xff]
    %v224 = vld [vmem:[%s3 + $0x28] sm:$0xff]
    %v225 = vld [vmem:[%s3 + $0x30] sm:$0xff]
    %v226 = vld [vmem:[%s3 + $0x38] sm:$0xff]
    %v227 = vld [vmem:[%s3 + $0x40] sm:$0xff]
    %v228 = vld [vmem:[%s3 + $0x48] sm:$0xff]
    %v229 = vld [vmem:[%s3 + $0x50] sm:$0xff]
    %v230 = vld [vmem:[%s3 + $0x58] sm:$0xff]
    %v231 = vld [vmem:[%s3 + $0x60] sm:$0xff]
    %v232 = vld [vmem:[%s3 + $0x68] sm:$0xff]
    %v233 = vld [vmem:[%s3 + $0x70] sm:$0xff]
    %v234 = vld [vmem:[%s3 + $0x78] sm:$0xff]
    %v235 = vld [vmem:[%s4] sm:$0x1]
    %v237 = vperm.slane %v235, 0
    %239 = vmatpush.msra.mxu0 %v234
    %240 = vmatpush.msra.mxu0 %v233
    %241 = vmatpush.msra.mxu0 %v232
    %242 = vmatpush.msra.mxu0 %v231
    %243 = vmatpush.msra.mxu0 %v230
    %244 = vmatpush.msra.mxu0 %v229
    %245 = vmatpush.msra.mxu0 %v228
    %246 = vmatpush.msra.mxu0 %v227
    %247 = vmatpush.msra.mxu0 %v226
    %248 = vmatpush.msra.mxu0 %v225
    %249 = vmatpush.msra.mxu0 %v224
    %250 = vmatpush.msra.mxu0 %v223
    %251 = vmatpush.msra.mxu0 %v222
    %252 = vmatpush.msra.mxu0 %v221
    %253 = vmatpush.msra.mxu0 %v220
    %254 = vmatpush.msra.mxu0 %v219
    %255 = vmatmul.f32.gmra.mxu0 %v203
    %v256 = vpop.f32.mrf.mxu0
    %v257 = vadd.f32 %v237, %v256
    %258 = vmatmul.f32.gmra.mxu0 %v204
    %v259 = vpop.f32.mrf.mxu0
    %v260 = vadd.f32 %v237, %v259
    %261 = vmatmul.f32.gmra.mxu0 %v205
    %v262 = vpop.f32.mrf.mxu0
    %v263 = vadd.f32 %v237, %v262
    %264 = vmatmul.f32.gmra.mxu0 %v206
    %v265 = vpop.f32.mrf.mxu0
    %v266 = vadd.f32 %v237, %v265
    %267 = vmatmul.f32.gmra.mxu0 %v207
    %v268 = vpop.f32.mrf.mxu0
    %v269 = vadd.f32 %v237, %v268
    %270 = vmatmul.f32.gmra.mxu0 %v208
    %v271 = vpop.f32.mrf.mxu0
    %v272 = vadd.f32 %v237, %v271
    %273 = vmatmul.f32.gmra.mxu0 %v209
    %v274 = vpop.f32.mrf.mxu0
    %v275 = vadd.f32 %v237, %v274
    %276 = vmatmul.f32.gmra.mxu0 %v210
    %v277 = vpop.f32.mrf.mxu0
    %v278 = vadd.f32 %v237, %v277
    %279 = vmatmul.f32.gmra.mxu0 %v211
    %v280 = vpop.f32.mrf.mxu0
    %v281 = vadd.f32 %v237, %v280
    %282 = vmatmul.f32.gmra.mxu0 %v212
    %v283 = vpop.f32.mrf.mxu0
    %v284 = vadd.f32 %v237, %v283
    %285 = vmatmul.f32.gmra.mxu0 %v213
    %v286 = vpop.f32.mrf.mxu0
    %v287 = vadd.f32 %v237, %v286
    %288 = vmatmul.f32.gmra.mxu0 %v214
    %v289 = vpop.f32.mrf.mxu0
    %v290 = vadd.f32 %v237, %v289
    %291 = vmatmul.f32.gmra.mxu0 %v215
    %v292 = vpop.f32.mrf.mxu0
    %v293 = vadd.f32 %v237, %v292
    %294 = vmatmul.f32.gmra.mxu0 %v216
    %v295 = vpop.f32.mrf.mxu0
    %v296 = vadd.f32 %v237, %v295
    %297 = vmatmul.f32.gmra.mxu0 %v217
    %v298 = vpop.f32.mrf.mxu0
    %v299 = vadd.f32 %v237, %v298
    %300 = vmatmul.f32.gmra.mxu0 %v218
    %v301 = vpop.f32.mrf.mxu0
    %v302 = vadd.f32 %v237, %v301
    %303 = vdwg.mxu0
    %v304 = vmax.f32 %v257, 0.0
    %v305 = vmax.f32 %v260, 0.0
    %v306 = vmax.f32 %v263, 0.0
    %v307 = vmax.f32 %v266, 0.0
    %v308 = vmax.f32 %v269, 0.0
    %v309 = vmax.f32 %v272, 0.0
    %v310 = vmax.f32 %v275, 0.0
    %v311 = vmax.f32 %v278, 0.0
    %v312 = vmax.f32 %v281, 0.0
    %v313 = vmax.f32 %v284, 0.0
    %v314 = vmax.f32 %v287, 0.0
    %v315 = vmax.f32 %v290, 0.0
    %v316 = vmax.f32 %v293, 0.0
    %v317 = vmax.f32 %v296, 0.0
    %v318 = vmax.f32 %v299, 0.0
    %v319 = vmax.f32 %v302, 0.0
    %v320 = vld [vmem:[#allocation2] sm:$0xff]
    %v321 = vld [vmem:[#allocation2 + $0x8] sm:$0xff]
    %v322 = vld [vmem:[#allocation2 + $0x10] sm:$0xff]
    %v323 = vld [vmem:[#allocation2 + $0x18] sm:$0xff]
    %v324 = vld [vmem:[#allocation2 + $0x20] sm:$0xff]
    %v325 = vld [vmem:[#allocation2 + $0x28] sm:$0xff]
    %v326 = vld [vmem:[#allocation2 + $0x30] sm:$0xff]
    %v327 = vld [vmem:[#allocation2 + $0x38] sm:$0xff]
    %v328 = vld [vmem:[#allocation2 + $0x40] sm:$0xff]
    %v329 = vld [vmem:[#allocation2 + $0x48] sm:$0xff]
    %v330 = vld [vmem:[#allocation2 + $0x50] sm:$0xff]
    %v331 = vld [vmem:[#allocation2 + $0x58] sm:$0xff]
    %v332 = vld [vmem:[#allocation2 + $0x60] sm:$0xff]
    %v333 = vld [vmem:[#allocation2 + $0x68] sm:$0xff]
    %v334 = vld [vmem:[#allocation2 + $0x70] sm:$0xff]
    %v335 = vld [vmem:[#allocation2 + $0x78] sm:$0xff]
    %v336 = vld [vmem:[%s6] sm:$0x1]
    %v338 = vperm.slane %v336, 0
    %340 = vmatpush.msra.mxu0 %v335
    %341 = vmatpush.msra.mxu0 %v334
    %342 = vmatpush.msra.mxu0 %v333
    %343 = vmatpush.msra.mxu0 %v332
    %344 = vmatpush.msra.mxu0 %v331
    %345 = vmatpush.msra.mxu0 %v330
    %346 = vmatpush.msra.mxu0 %v329
    %347 = vmatpush.msra.mxu0 %v328
    %348 = vmatpush.msra.mxu0 %v327
    %349 = vmatpush.msra.mxu0 %v326
    %350 = vmatpush.msra.mxu0 %v325
    %351 = vmatpush.msra.mxu0 %v324
    %352 = vmatpush.msra.mxu0 %v323
    %353 = vmatpush.msra.mxu0 %v322
    %354 = vmatpush.msra.mxu0 %v321
    %355 = vmatpush.msra.mxu0 %v320
    %356 = vmatmul.f32.gmra.mxu0 %v304
    %v357 = vpop.f32.mrf.mxu0
    %v358 = vadd.f32 %v338, %v357
    %359 = vmatmul.f32.gmra.mxu0 %v305
    %v360 = vpop.f32.mrf.mxu0
    %v361 = vadd.f32 %v338, %v360
    %362 = vmatmul.f32.gmra.mxu0 %v306
    %v363 = vpop.f32.mrf.mxu0
    %v364 = vadd.f32 %v338, %v363
    %365 = vmatmul.f32.gmra.mxu0 %v307
    %v366 = vpop.f32.mrf.mxu0
    %v367 = vadd.f32 %v338, %v366
    %368 = vmatmul.f32.gmra.mxu0 %v308
    %v369 = vpop.f32.mrf.mxu0
    %v370 = vadd.f32 %v338, %v369
    %371 = vmatmul.f32.gmra.mxu0 %v309
    %v372 = vpop.f32.mrf.mxu0
    %v373 = vadd.f32 %v338, %v372
    %374 = vmatmul.f32.gmra.mxu0 %v310
    %v375 = vpop.f32.mrf.mxu0
    %v376 = vadd.f32 %v338, %v375
    %377 = vmatmul.f32.gmra.mxu0 %v311
    %v378 = vpop.f32.mrf.mxu0
    %v379 = vadd.f32 %v338, %v378
    %380 = vmatmul.f32.gmra.mxu0 %v312
    %v381 = vpop.f32.mrf.mxu0
    %v382 = vadd.f32 %v338, %v381
    %383 = vmatmul.f32.gmra.mxu0 %v313
    %v384 = vpop.f32.mrf.mxu0
    %v385 = vadd.f32 %v338, %v384
    %386 = vmatmul.f32.gmra.mxu0 %v314
    %v387 = vpop.f32.mrf.mxu0
    %v388 = vadd.f32 %v338, %v387
    %389 = vmatmul.f32.gmra.mxu0 %v315
    %v390 = vpop.f32.mrf.mxu0
    %v391 = vadd.f32 %v338, %v390
    %392 = vmatmul.f32.gmra.mxu0 %v316
    %v393 = vpop.f32.mrf.mxu0
    %v394 = vadd.f32 %v338, %v393
    %395 = vmatmul.f32.gmra.mxu0 %v317
    %v396 = vpop.f32.mrf.mxu0
    %v397 = vadd.f32 %v338, %v396
    %398 = vmatmul.f32.gmra.mxu0 %v318
    %v399 = vpop.f32.mrf.mxu0
    %v400 = vadd.f32 %v338, %v399
    %401 = vmatmul.f32.gmra.mxu0 %v319
    %v402 = vpop.f32.mrf.mxu0
    %v403 = vadd.f32 %v338, %v402
    %404 = vdwg.mxu0
    %v405 = vld [vmem:[#allocation5] sm:$0xff]
    %v406 = vld [vmem:[#allocation5 + $0x8] sm:$0xff]
    %v407 = vld [vmem:[#allocation5 + $0x10] sm:$0xff]
    %v408 = vld [vmem:[#allocation5 + $0x18] sm:$0xff]
    %v409 = vld [vmem:[%s8] sm:$0x1]
    %410 = vmatpush.msra.mxu0 0.0
    %411 = vmatpush.msra.mxu0 0.0
    %412 = vmatpush.msra.mxu0 0.0
    %413 = vmatpush.msra.mxu0 0.0
    %414 = vmatpush.msra.mxu0 0.0
    %415 = vmatpush.msra.mxu0 0.0
    %416 = vmatpush.msra.mxu0 0.0
    %417 = vmatpush.msra.mxu0 0.0
    %418 = vmatpush.msra.mxu0 0.0
    %419 = vmatpush.msra.mxu0 0.0
    %420 = vmatpush.msra.mxu0 0.0
    %421 = vmatpush.msra.mxu0 0.0
    %422 = vmatpush.msra.mxu0 %v408
    %423 = vmatpush.msra.mxu0 %v407
    %424 = vmatpush.msra.mxu0 %v406
    %425 = vmatpush.msra.mxu0 %v405
    %426 = vmatmul.f32.gmra.mxu0 %v91
    %v427 = vpop.f32.mrf.mxu0
    %v428 = vadd.f32 0.0, %v427
    %429 = vmatmul.f32.gmra.mxu0 %v94
    %v430 = vpop.f32.mrf.mxu0
    %v431 = vadd.f32 0.0, %v430
    %432 = vmatmul.f32.gmra.mxu0 %v97
    %v433 = vpop.f32.mrf.mxu0
    %v434 = vadd.f32 0.0, %v433
    %435 = vmatmul.f32.gmra.mxu0 %v100
    %v436 = vpop.f32.mrf.mxu0
    %v437 = vadd.f32 0.0, %v436
    %438 = vmatmul.f32.gmra.mxu0 %v103
    %v439 = vpop.f32.mrf.mxu0
    %v440 = vadd.f32 0.0, %v439
    %441 = vmatmul.f32.gmra.mxu0 %v106
    %v442 = vpop.f32.mrf.mxu0
    %v443 = vadd.f32 0.0, %v442
    %444 = vmatmul.f32.gmra.mxu0 %v109
    %v445 = vpop.f32.mrf.mxu0
    %v446 = vadd.f32 0.0, %v445
    %447 = vmatmul.f32.gmra.mxu0 %v112
    %v448 = vpop.f32.mrf.mxu0
    %v449 = vadd.f32 0.0, %v448
    %450 = vmatmul.f32.gmra.mxu0 %v115
    %v451 = vpop.f32.mrf.mxu0
    %v452 = vadd.f32 0.0, %v451
    %453 = vmatmul.f32.gmra.mxu0 %v118
    %v454 = vpop.f32.mrf.mxu0
    %v455 = vadd.f32 0.0, %v454
    %456 = vmatmul.f32.gmra.mxu0 %v121
    %v457 = vpop.f32.mrf.mxu0
    %v458 = vadd.f32 0.0, %v457
    %459 = vmatmul.f32.gmra.mxu0 %v124
    %v460 = vpop.f32.mrf.mxu0
    %v461 = vadd.f32 0.0, %v460
    %462 = vmatmul.f32.gmra.mxu0 %v127
    %v463 = vpop.f32.mrf.mxu0
    %v464 = vadd.f32 0.0, %v463
    %465 = vmatmul.f32.gmra.mxu0 %v130
    %v466 = vpop.f32.mrf.mxu0
    %v467 = vadd.f32 0.0, %v466
    %468 = vmatmul.f32.gmra.mxu0 %v133
    %v469 = vpop.f32.mrf.mxu0
    %v470 = vadd.f32 0.0, %v469
    %471 = vmatmul.f32.gmra.mxu0 %v136
    %v472 = vpop.f32.mrf.mxu0
    %v473 = vadd.f32 0.0, %v472
    %474 = vdwg.mxu0
    %v475 = vadd.f32 %v358, %v428
    %v476 = vadd.f32 %v361, %v431
    %v477 = vadd.f32 %v364, %v434
    %v478 = vadd.f32 %v367, %v437
    %v479 = vadd.f32 %v370, %v440
    %v480 = vadd.f32 %v373, %v443
    %v481 = vadd.f32 %v376, %v446
    %v482 = vadd.f32 %v379, %v449
    %v483 = vadd.f32 %v382, %v452
    %v484 = vadd.f32 %v385, %v455
    %v485 = vadd.f32 %v388, %v458
    %v486 = vadd.f32 %v391, %v461
    %v487 = vadd.f32 %v394, %v464
    %v488 = vadd.f32 %v397, %v467
    %v489 = vadd.f32 %v400, %v470
    %v490 = vadd.f32 %v403, %v473
    %v492 = vperm.slane %v409, 0
    %v494 = vadd.f32 %v475, %v492
    %v495 = vadd.f32 %v476, %v492
    %v496 = vadd.f32 %v477, %v492
    %v497 = vadd.f32 %v478, %v492
    %v498 = vadd.f32 %v479, %v492
    %v499 = vadd.f32 %v480, %v492
    %v500 = vadd.f32 %v481, %v492
    %v501 = vadd.f32 %v482, %v492
    %v502 = vadd.f32 %v483, %v492
    %v503 = vadd.f32 %v484, %v492
    %v504 = vadd.f32 %v485, %v492
    %v505 = vadd.f32 %v486, %v492
    %v506 = vadd.f32 %v487, %v492
    %v507 = vadd.f32 %v488, %v492
    %v508 = vadd.f32 %v489, %v492
    %v509 = vadd.f32 %v490, %v492
    %510 = vst [vmem:[#allocation7] sm:$0xff] %v494
    %511 = vst [vmem:[#allocation7 + $0x8] sm:$0xff] %v495
    %512 = vst [vmem:[#allocation7 + $0x10] sm:$0xff] %v496
    %513 = vst [vmem:[#allocation7 + $0x18] sm:$0xff] %v497
    %514 = vst [vmem:[#allocation7 + $0x20] sm:$0xff] %v498
    %515 = vst [vmem:[#allocation7 + $0x28] sm:$0xff] %v499
    %516 = vst [vmem:[#allocation7 + $0x30] sm:$0xff] %v500
    %517 = vst [vmem:[#allocation7 + $0x38] sm:$0xff] %v501
    %518 = vst [vmem:[#allocation7 + $0x40] sm:$0xff] %v502
    %519 = vst [vmem:[#allocation7 + $0x48] sm:$0xff] %v503
    %520 = vst [vmem:[#allocation7 + $0x50] sm:$0xff] %v504
    %521 = vst [vmem:[#allocation7 + $0x58] sm:$0xff] %v505
    %522 = vst [vmem:[#allocation7 + $0x60] sm:$0xff] %v506
    %523 = vst [vmem:[#allocation7 + $0x68] sm:$0xff] %v507
    %524 = vst [vmem:[#allocation7 + $0x70] sm:$0xff] %v508
    %525 = vst [vmem:[#allocation7 + $0x78] sm:$0xff] %v509
    // Predicated region
    $region46: #{tpu_custom_call.1} parent=1 // pred_check
      _
    $region47: #{tpu_custom_call.1} parent=1 // pred_check_branch
      %527 = sbr.rel (0) target = $region49
    $region48: #{tpu_custom_call.1} parent=1 // pred_region
      %529 = vsyncadd [#allocation4], 0
      %s530 = sshll.u32 [#allocation7], 4
      %s531 = int_to_ptr.vmem [resolvable:$true] %s530
      %s532 = sshll.u32 %s9, 4
      %s533 = int_to_ptr.hbm [resolvable:$true] %s532
      %538 = dma.vmem_to_hbm [thread:$0]  %s531, 2048, %s533, [#allocation4], 128, 128, 8
    $region49: #{tpu_custom_call.1} parent=1 // pred_fallthru
      _
    // Predicated region
    $region50: #{tpu_custom_call.1} parent=1 // pred_check
      _
    $region51: #{tpu_custom_call.1} parent=1 // pred_check_branch
      %540 = sbr.rel (0) target = $region53
    $region52: #{tpu_custom_call.1} parent=1 // pred_region
      %542 = dma.done [#allocation4], 2048
    $region53: #{tpu_custom_call.1} parent=1 // pred_fallthru
      _
    %543 = vsyncpa [#allocation3], 1
    %544 = vsyncpa [#allocation6], 1
    %545 = vsyncpa [#allocation4], 1

</llo_original>
